<compile_context>
chip_gen: v5e
topology: v5e:2x2
jax: 0.10.0
libtpu: 0.0.40
codegen_flags: <defaults>
</compile_context>

<pallas_src>
import jax
import jax.numpy as jnp
import numpy as np
from jax.experimental import pallas as pl
from jax.experimental.pallas import tpu as pltpu

EPS = 1e-5


def _make_kernel(B, H, W, C):
    M = B * H                       # rows of the activation slabs
    WC = W * C                      # lane width of the activation slabs
    inv_n = 1.0 / float(B * H * W)  # BN normalizer (elements per channel)

    def bn_scale_shift(acc, gamma_lane, beta_lane):
        """Single-pass train-mode BN folded to a per-lane (1, W*C) scale/shift.

        Row-reduce sum / sum-of-squares, then fold the W lane groups with a
        log2(W) pltpu.roll tree-reduce: every C-wide lane group ends up holding
        the full per-channel value, so no concat / broadcast-back is needed."""
        lane_sum = jnp.sum(acc, axis=0, keepdims=True)           # (1, WC)
        lane_ssq = jnp.sum(acc * acc, axis=0, keepdims=True)     # (1, WC)
        stats = jnp.concatenate([lane_sum, lane_ssq], axis=0)    # (2, WC)
        shift = C
        while shift < WC:                                        # static unroll
            stats = stats + pltpu.roll(stats, shift, axis=1)
            shift *= 2
        mean = stats[0:1, :] * inv_n                             # (1, WC)
        var = stats[1:2, :] * inv_n - mean * mean                # biased var
        scale = gamma_lane * jax.lax.rsqrt(var + EPS)            # (1, WC)
        offset = beta_lane - mean * scale                        # (1, WC)
        return scale, offset

    def kernel(x_ref, p_ref, t1_ref, t2_ref, out_ref, slab_ref):
        # slab_ref: (B, H+2, WC) bf16 staging scratch; zero the 1-row halos ONCE.
        slab_ref[:, 0:1, :] = jnp.zeros((B, 1, WC), jnp.bfloat16)
        slab_ref[:, H + 1:H + 2, :] = jnp.zeros((B, 1, WC), jnp.bfloat16)

        def conv_operand(act_bf16):
            # One bf16 cast per conv: stage the interior, then build the
            # lane-concatenated (M, 3*WC) operand for a single K=3*WC matmul.
            slab_ref[:, 1:H + 1, :] = act_bf16.reshape(B, H, WC)
            return jnp.concatenate(
                [slab_ref[:, 0:H, :].reshape(M, WC),       # dy = 0 (row y-1)
                 act_bf16,                                  # dy = 1 (row y)
                 slab_ref[:, 2:H + 2, :].reshape(M, WC)],   # dy = 2 (row y+1)
                axis=1)

        x = x_ref[...]                                      # (M, WC) f32

        # ---- conv1 (one MXU matmul) + bn1 (batch stats) + ReLU ----
        a1 = conv_operand(x.astype(jnp.bfloat16))
        acc1 = jnp.dot(a1, t1_ref[...], preferred_element_type=jnp.float32)
        s1, o1 = bn_scale_shift(acc1, p_ref[0:1, :], p_ref[1:2, :])
        h1 = jnp.maximum(acc1 * s1 + o1, 0.0)               # (M, WC) f32

        # ---- conv2 (one MXU matmul) + bn2 + residual + ReLU ----
        a2 = conv_operand(h1.astype(jnp.bfloat16))
        acc2 = jnp.dot(a2, t2_ref[...], preferred_element_type=jnp.float32)
        s2, o2 = bn_scale_shift(acc2, p_ref[2:3, :], p_ref[3:4, :])
        out_ref[...] = jnp.maximum(acc2 * s2 + o2 + x, 0.0)

    return kernel


def _block_toeplitz(w_hwio, W):
    """(3,3,Cin,Cout) conv taps -> (3*W*Cin, W*Cout) block-Toeplitz weight slab.

    T[dy*W*Cin + xin*Cin + ci, xout*Cout + co] = w[dy, xin - xout + 1, ci, co]
    (zero when |xin - xout| > 1), so both the x-padding of the 3x3/pad-1 conv
    and the three x-taps live inside the weight matrix; with the three vertical
    taps lane-concatenated in-kernel, each conv is exactly ONE MXU matmul.
    """
    taps = []
    for dy in range(3):
        t = sum(jnp.kron(jnp.eye(W, k=1 - dx, dtype=jnp.float32), w_hwio[dy, dx])
                for dx in range(3))
        taps.append(t)
    return jnp.concatenate(taps, axis=0)        # (3*W*Cin, W*Cout)


@jax.jit
def basic_block_forward(x_nchw, w1, g1, b1, w2, g2, b2):
    """x_nchw: (B, C, H, W) f32; w*: (Cout, Cin, 3, 3) PyTorch OIHW layout."""
    B, C, H, W = x_nchw.shape
    Cout = w1.shape[0]
    assert C == Cout, "BasicBlock with downsample=None requires inplanes == planes"
    WC = W * C
    assert WC % 128 == 0, "lane-dense layout wants W*C to be a multiple of 128"
    assert W & (W - 1) == 0, "lane roll tree-reduce needs power-of-two W"

    # Lane-dense activation slab: (B*H, W*C) f32 (also used as the residual).
    x_slab = jnp.transpose(x_nchw, (0, 2, 3, 1)).astype(jnp.float32).reshape(B * H, WC)

    # Block-Toeplitz weight slabs (K = 3*W*C per conv), bf16 on the MXU.
    w1_hwio = jnp.transpose(w1, (2, 3, 1, 0)).astype(jnp.float32)   # (3,3,Cin,Cout)
    w2_hwio = jnp.transpose(w2, (2, 3, 1, 0)).astype(jnp.float32)
    t1 = _block_toeplitz(w1_hwio, W).astype(jnp.bfloat16)           # (3*WC, WC)
    t2 = _block_toeplitz(w2_hwio, W).astype(jnp.bfloat16)           # (3*WC, WC)

    # All four BN params in one (4, W*C) tile, pre-replicated across lane groups.
    params = jnp.stack([jnp.tile(g1.astype(jnp.float32), W),
                        jnp.tile(b1.astype(jnp.float32), W),
                        jnp.tile(g2.astype(jnp.float32), W),
                        jnp.tile(b2.astype(jnp.float32), W)], axis=0)

    vmem = pl.BlockSpec(memory_space=pltpu.MemorySpace.VMEM)
    out2d = pl.pallas_call(
        _make_kernel(B, H, W, C),
        out_shape=jax.ShapeDtypeStruct((B * H, WC), jnp.float32),
        in_specs=[vmem, vmem, vmem, vmem],
        out_specs=vmem,
        scratch_shapes=[pltpu.VMEM((B, H + 2, WC), jnp.bfloat16)],
    )(x_slab, params, t1, t2)

    out = out2d.reshape(B, H, W, Cout)
    return jnp.transpose(out, (0, 3, 1, 2))                         # back to NCHW


# ---------------------------- pure-JAX reference ----------------------------
def _reference(x, w1, g1, b1, w2, g2, b2):
    def conv(x, w):
        return jax.lax.conv_general_dilated(
            x, w, window_strides=(1, 1), padding=((1, 1), (1, 1)),
            dimension_numbers=('NCHW', 'OIHW', 'NCHW'))

    def bn(x, g, b):
        mean = jnp.mean(x, axis=(0, 2, 3), keepdims=True)
        var = jnp.mean((x - mean) ** 2, axis=(0, 2, 3), keepdims=True)
        return ((x - mean) * jax.lax.rsqrt(var + EPS)
                * g.reshape(1, -1, 1, 1) + b.reshape(1, -1, 1, 1))

    out = jax.nn.relu(bn(conv(x, w1), g1, b1))
    out = bn(conv(out, w2), g2, b2)
    return jax.nn.relu(out + x)


if __name__ == "__main__":
    B, C, H, W = 2, 8, 16, 16   # W*C = 128 -> fully lane-dense slabs
    key = jax.random.PRNGKey(0)
    kx, k1, k2, kg1, kb1, kg2, kb2 = jax.random.split(key, 7)

    x = jax.random.normal(kx, (B, C, H, W), jnp.float32)
    w1 = 0.1 * jax.random.normal(k1, (C, C, 3, 3), jnp.float32)   # conv1.weight (OIHW)
    w2 = 0.1 * jax.random.normal(k2, (C, C, 3, 3), jnp.float32)   # conv2.weight (OIHW)
    g1 = 1.0 + 0.1 * jax.random.normal(kg1, (C,), jnp.float32)    # bn1.weight
    b1 = 0.1 * jax.random.normal(kb1, (C,), jnp.float32)          # bn1.bias
    g2 = 1.0 + 0.1 * jax.random.normal(kg2, (C,), jnp.float32)    # bn2.weight
    b2 = 0.1 * jax.random.normal(kb2, (C,), jnp.float32)          # bn2.bias

    out = jax.block_until_ready(basic_block_forward(x, w1, g1, b1, w2, g2, b2))
    ref = jax.block_until_ready(_reference(x, w1, g1, b1, w2, g2, b2))

    # MXU matmuls run in bf16 (f32 accumulation); compare against the all-f32
    # reference with a bf16-appropriate tolerance.
    np.testing.assert_allclose(np.asarray(out), np.asarray(ref), rtol=2e-2, atol=2e-2)

    print("KERNEL_OK")
</pallas_src>

<mosaic_0001>
module attributes {stable_mosaic.version = 11 : i64} {
  func.func @kernel(%arg0: memref<32x128xf32, #tpu.memory_space<vmem>>, %arg1: memref<4x128xf32, #tpu.memory_space<vmem>>, %arg2: memref<384x128xbf16, #tpu.memory_space<vmem>>, %arg3: memref<384x128xbf16, #tpu.memory_space<vmem>>, %arg4: memref<32x128xf32, #tpu.memory_space<vmem>>, %arg5: memref<2x18x128xbf16, #tpu.memory_space<vmem>>) attributes {dimension_semantics = [], scalar_prefetch = 0 : i64, scratch_operands = 1 : i64, tpu.core_type = #tpu.core_type<tc>} {
    %cst = arith.constant 0.000000e+00 : bf16
    %0 = vector.broadcast %cst : bf16 to vector<2x1x128xbf16>
    %c0 = arith.constant 0 : index
    %c0_0 = arith.constant 0 : index
    %c0_1 = arith.constant 0 : index
    %1 = vector.load %arg5[%c0, %c0_0, %c0_1] : memref<2x18x128xbf16, #tpu.memory_space<vmem>>, vector<2x1x128xbf16>
    tpu.vector_store %arg5[%c0, %c0_0, %c0_1], %0 {strides = array<i32>} : memref<2x18x128xbf16, #tpu.memory_space<vmem>>, vector<2x1x128xbf16>,
    %cst_2 = arith.constant 0.000000e+00 : bf16
    %2 = vector.broadcast %cst_2 : bf16 to vector<2x1x128xbf16>
    %c0_3 = arith.constant 0 : index
    %c17 = arith.constant 17 : index
    %c0_4 = arith.constant 0 : index
    %3 = vector.load %arg5[%c0_3, %c17, %c0_4] : memref<2x18x128xbf16, #tpu.memory_space<vmem>>, vector<2x1x128xbf16>
    tpu.vector_store %arg5[%c0_3, %c17, %c0_4], %2 {strides = array<i32>} : memref<2x18x128xbf16, #tpu.memory_space<vmem>>, vector<2x1x128xbf16>,
    %c0_5 = arith.constant 0 : index
    %c0_6 = arith.constant 0 : index
    %4 = vector.load %arg0[%c0_5, %c0_6] : memref<32x128xf32, #tpu.memory_space<vmem>>, vector<32x128xf32>
    %5 = arith.truncf %4 : vector<32x128xf32> to vector<32x128xbf16>
    %6 = vector.shape_cast %5 : vector<32x128xbf16> to vector<2x16x128xbf16>
    %c0_7 = arith.constant 0 : index
    %c1 = arith.constant 1 : index
    %c0_8 = arith.constant 0 : index
    %7 = vector.load %arg5[%c0_7, %c1, %c0_8] : memref<2x18x128xbf16, #tpu.memory_space<vmem>>, vector<2x16x128xbf16>
    tpu.vector_store %arg5[%c0_7, %c1, %c0_8], %6 {strides = array<i32>} : memref<2x18x128xbf16, #tpu.memory_space<vmem>>, vector<2x16x128xbf16>,
    %c0_9 = arith.constant 0 : index
    %c0_10 = arith.constant 0 : index
    %c0_11 = arith.constant 0 : index
    %8 = vector.load %arg5[%c0_9, %c0_10, %c0_11] : memref<2x18x128xbf16, #tpu.memory_space<vmem>>, vector<2x16x128xbf16>
    %9 = vector.shape_cast %8 : vector<2x16x128xbf16> to vector<32x128xbf16>
    %c0_12 = arith.constant 0 : index
    %c2 = arith.constant 2 : index
    %c0_13 = arith.constant 0 : index
    %10 = vector.load %arg5[%c0_12, %c2, %c0_13] : memref<2x18x128xbf16, #tpu.memory_space<vmem>>, vector<2x16x128xbf16>
    %11 = vector.shape_cast %10 : vector<2x16x128xbf16> to vector<32x128xbf16>
    %12 = tpu.concatenate %9, %5, %11 in 1 : vector<32x128xbf16>, vector<32x128xbf16>, vector<32x128xbf16> -> vector<32x384xbf16>
    %c0_14 = arith.constant 0 : index
    %c0_15 = arith.constant 0 : index
    %13 = vector.load %arg2[%c0_14, %c0_15] : memref<384x128xbf16, #tpu.memory_space<vmem>>, vector<384x128xbf16>
    %cst_16 = arith.constant dense<0.000000e+00> : vector<32x128xf32>
    %14 = tpu.matmul %12, %13, %cst_16 {dimension_numbers = #tpu.dot_dimension_numbers<[1], [0], [0], [1], [0, 0, 1, 1], [], []>} : vector<32x384xbf16>, vector<384x128xbf16>, vector<32x128xf32> -> vector<32x128xf32>
    %c0_17 = arith.constant 0 : index
    %c0_18 = arith.constant 0 : index
    %15 = vector.load %arg1[%c0_17, %c0_18] : memref<4x128xf32, #tpu.memory_space<vmem>>, vector<1x128xf32>
    %c1_19 = arith.constant 1 : index
    %c0_20 = arith.constant 0 : index
    %16 = vector.load %arg1[%c1_19, %c0_20] : memref<4x128xf32, #tpu.memory_space<vmem>>, vector<1x128xf32>
    %cst_21 = arith.constant dense<0.000000e+00> : vector<128xf32>
    %17 = vector.multi_reduction <add>, %14, %cst_21 [0] : vector<32x128xf32> to vector<128xf32>
    %18 = vector.shape_cast %17 : vector<128xf32> to vector<1x128xf32>
    %19 = arith.mulf %14, %14 : vector<32x128xf32>
    %cst_22 = arith.constant dense<0.000000e+00> : vector<128xf32>
    %20 = vector.multi_reduction <add>, %19, %cst_22 [0] : vector<32x128xf32> to vector<128xf32>
    %21 = vector.shape_cast %20 : vector<128xf32> to vector<1x128xf32>
    %22 = tpu.concatenate %18, %21 in 0 : vector<1x128xf32>, vector<1x128xf32> -> vector<2x128xf32>
    %c8_i32 = arith.constant 8 : i32
    %23 = tpu.dynamic_rotate %22 by %c8_i32 dim 1 : vector<2x128xf32>, i32 -> vector<2x128xf32>
    %24 = arith.addf %22, %23 : vector<2x128xf32>
    %c16_i32 = arith.constant 16 : i32
    %25 = tpu.dynamic_rotate %24 by %c16_i32 dim 1 : vector<2x128xf32>, i32 -> vector<2x128xf32>
    %26 = arith.addf %24, %25 : vector<2x128xf32>
    %c32_i32 = arith.constant 32 : i32
    %27 = tpu.dynamic_rotate %26 by %c32_i32 dim 1 : vector<2x128xf32>, i32 -> vector<2x128xf32>
    %28 = arith.addf %26, %27 : vector<2x128xf32>
    %c64_i32 = arith.constant 64 : i32
    %29 = tpu.dynamic_rotate %28 by %c64_i32 dim 1 : vector<2x128xf32>, i32 -> vector<2x128xf32>
    %30 = arith.addf %28, %29 : vector<2x128xf32>
    %31 = vector.extract_strided_slice %30 {offsets = [0, 0], sizes = [1, 128], strides = [1, 1]} : vector<2x128xf32> to vector<1x128xf32>
    %cst_23 = arith.constant 0.001953125 : f32
    %32 = vector.broadcast %cst_23 : f32 to vector<1x128xf32>
    %33 = arith.mulf %31, %32 : vector<1x128xf32>
    %34 = vector.extract_strided_slice %30 {offsets = [1, 0], sizes = [1, 128], strides = [1, 1]} : vector<2x128xf32> to vector<1x128xf32>
    %cst_24 = arith.constant 0.001953125 : f32
    %35 = vector.broadcast %cst_24 : f32 to vector<1x128xf32>
    %36 = arith.mulf %34, %35 : vector<1x128xf32>
    %37 = arith.mulf %33, %33 : vector<1x128xf32>
    %38 = arith.subf %36, %37 : vector<1x128xf32>
    %cst_25 = arith.constant 9.99999974E-6 : f32
    %39 = vector.broadcast %cst_25 : f32 to vector<1x128xf32>
    %40 = arith.addf %38, %39 : vector<1x128xf32>
    %41 = math.rsqrt %40 : vector<1x128xf32>
    %42 = arith.mulf %15, %41 : vector<1x128xf32>
    %43 = arith.mulf %33, %42 : vector<1x128xf32>
    %44 = arith.subf %16, %43 : vector<1x128xf32>
    %45 = vector.broadcast %42 : vector<1x128xf32> to vector<32x128xf32>
    %46 = arith.mulf %14, %45 : vector<32x128xf32>
    %47 = vector.broadcast %44 : vector<1x128xf32> to vector<32x128xf32>
    %48 = arith.addf %46, %47 : vector<32x128xf32>
    %cst_26 = arith.constant 0.000000e+00 : f32
    %49 = vector.broadcast %cst_26 : f32 to vector<32x128xf32>
    %50 = arith.maximumf %48, %49 : vector<32x128xf32>
    %51 = arith.truncf %50 : vector<32x128xf32> to vector<32x128xbf16>
    %52 = vector.shape_cast %51 : vector<32x128xbf16> to vector<2x16x128xbf16>
    %c0_27 = arith.constant 0 : index
    %c1_28 = arith.constant 1 : index
    %c0_29 = arith.constant 0 : index
    %53 = vector.load %arg5[%c0_27, %c1_28, %c0_29] : memref<2x18x128xbf16, #tpu.memory_space<vmem>>, vector<2x16x128xbf16>
    tpu.vector_store %arg5[%c0_27, %c1_28, %c0_29], %52 {strides = array<i32>} : memref<2x18x128xbf16, #tpu.memory_space<vmem>>, vector<2x16x128xbf16>,
    %c0_30 = arith.constant 0 : index
    %c0_31 = arith.constant 0 : index
    %c0_32 = arith.constant 0 : index
    %54 = vector.load %arg5[%c0_30, %c0_31, %c0_32] : memref<2x18x128xbf16, #tpu.memory_space<vmem>>, vector<2x16x128xbf16>
    %55 = vector.shape_cast %54 : vector<2x16x128xbf16> to vector<32x128xbf16>
    %c0_33 = arith.constant 0 : index
    %c2_34 = arith.constant 2 : index
    %c0_35 = arith.constant 0 : index
    %56 = vector.load %arg5[%c0_33, %c2_34, %c0_35] : memref<2x18x128xbf16, #tpu.memory_space<vmem>>, vector<2x16x128xbf16>
    %57 = vector.shape_cast %56 : vector<2x16x128xbf16> to vector<32x128xbf16>
    %58 = tpu.concatenate %55, %51, %57 in 1 : vector<32x128xbf16>, vector<32x128xbf16>, vector<32x128xbf16> -> vector<32x384xbf16>
    %c0_36 = arith.constant 0 : index
    %c0_37 = arith.constant 0 : index
    %59 = vector.load %arg3[%c0_36, %c0_37] : memref<384x128xbf16, #tpu.memory_space<vmem>>, vector<384x128xbf16>
    %cst_38 = arith.constant dense<0.000000e+00> : vector<32x128xf32>
    %60 = tpu.matmul %58, %59, %cst_38 {dimension_numbers = #tpu.dot_dimension_numbers<[1], [0], [0], [1], [0, 0, 1, 1], [], []>} : vector<32x384xbf16>, vector<384x128xbf16>, vector<32x128xf32> -> vector<32x128xf32>
    %c2_39 = arith.constant 2 : index
    %c0_40 = arith.constant 0 : index
    %61 = vector.load %arg1[%c2_39, %c0_40] : memref<4x128xf32, #tpu.memory_space<vmem>>, vector<1x128xf32>
    %c3 = arith.constant 3 : index
    %c0_41 = arith.constant 0 : index
    %62 = vector.load %arg1[%c3, %c0_41] : memref<4x128xf32, #tpu.memory_space<vmem>>, vector<1x128xf32>
    %cst_42 = arith.constant dense<0.000000e+00> : vector<128xf32>
    %63 = vector.multi_reduction <add>, %60, %cst_42 [0] : vector<32x128xf32> to vector<128xf32>
    %64 = vector.shape_cast %63 : vector<128xf32> to vector<1x128xf32>
    %65 = arith.mulf %60, %60 : vector<32x128xf32>
    %cst_43 = arith.constant dense<0.000000e+00> : vector<128xf32>
    %66 = vector.multi_reduction <add>, %65, %cst_43 [0] : vector<32x128xf32> to vector<128xf32>
    %67 = vector.shape_cast %66 : vector<128xf32> to vector<1x128xf32>
    %68 = tpu.concatenate %64, %67 in 0 : vector<1x128xf32>, vector<1x128xf32> -> vector<2x128xf32>
    %c8_i32_44 = arith.constant 8 : i32
    %69 = tpu.dynamic_rotate %68 by %c8_i32_44 dim 1 : vector<2x128xf32>, i32 -> vector<2x128xf32>
    %70 = arith.addf %68, %69 : vector<2x128xf32>
    %c16_i32_45 = arith.constant 16 : i32
    %71 = tpu.dynamic_rotate %70 by %c16_i32_45 dim 1 : vector<2x128xf32>, i32 -> vector<2x128xf32>
    %72 = arith.addf %70, %71 : vector<2x128xf32>
    %c32_i32_46 = arith.constant 32 : i32
    %73 = tpu.dynamic_rotate %72 by %c32_i32_46 dim 1 : vector<2x128xf32>, i32 -> vector<2x128xf32>
    %74 = arith.addf %72, %73 : vector<2x128xf32>
    %c64_i32_47 = arith.constant 64 : i32
    %75 = tpu.dynamic_rotate %74 by %c64_i32_47 dim 1 : vector<2x128xf32>, i32 -> vector<2x128xf32>
    %76 = arith.addf %74, %75 : vector<2x128xf32>
    %77 = vector.extract_strided_slice %76 {offsets = [0, 0], sizes = [1, 128], strides = [1, 1]} : vector<2x128xf32> to vector<1x128xf32>
    %cst_48 = arith.constant 0.001953125 : f32
    %78 = vector.broadcast %cst_48 : f32 to vector<1x128xf32>
    %79 = arith.mulf %77, %78 : vector<1x128xf32>
    %80 = vector.extract_strided_slice %76 {offsets = [1, 0], sizes = [1, 128], strides = [1, 1]} : vector<2x128xf32> to vector<1x128xf32>
    %cst_49 = arith.constant 0.001953125 : f32
    %81 = vector.broadcast %cst_49 : f32 to vector<1x128xf32>
    %82 = arith.mulf %80, %81 : vector<1x128xf32>
    %83 = arith.mulf %79, %79 : vector<1x128xf32>
    %84 = arith.subf %82, %83 : vector<1x128xf32>
    %cst_50 = arith.constant 9.99999974E-6 : f32
    %85 = vector.broadcast %cst_50 : f32 to vector<1x128xf32>
    %86 = arith.addf %84, %85 : vector<1x128xf32>
    %87 = math.rsqrt %86 : vector<1x128xf32>
    %88 = arith.mulf %61, %87 : vector<1x128xf32>
    %89 = arith.mulf %79, %88 : vector<1x128xf32>
    %90 = arith.subf %62, %89 : vector<1x128xf32>
    %91 = vector.broadcast %88 : vector<1x128xf32> to vector<32x128xf32>
    %92 = arith.mulf %60, %91 : vector<32x128xf32>
    %93 = vector.broadcast %90 : vector<1x128xf32> to vector<32x128xf32>
    %94 = arith.addf %92, %93 : vector<32x128xf32>
    %95 = arith.addf %94, %4 : vector<32x128xf32>
    %cst_51 = arith.constant 0.000000e+00 : f32
    %96 = vector.broadcast %cst_51 : f32 to vector<32x128xf32>
    %97 = arith.maximumf %95, %96 : vector<32x128xf32>
    %c0_52 = arith.constant 0 : index
    %c0_53 = arith.constant 0 : index
    %98 = vector.load %arg4[%c0_52, %c0_53] : memref<32x128xf32, #tpu.memory_space<vmem>>, vector<32x128xf32>
    tpu.vector_store %arg4[%c0_52, %c0_53], %97 {strides = array<i32>} : memref<32x128xf32, #tpu.memory_space<vmem>>, vector<32x128xf32>,
    return
  }
}

</mosaic_0001>

<llo_original>
// kernel: tile.23
$region0: #{tile.23}
  #allocation0 [shape = 's32[1]{0}', space=sflag, size = 0x4, scoped, tag = 'scoped memory for tile.23']
  %s0 = inlined_call_operand.vmem [shape: f32[8], index: 0, kind: input, shape index: {}]
  %s1 = inlined_call_operand.vmem [shape: f32[16,8], index: 1, kind: output, shape index: {}]
  // Predicated region
  $region2: #{tile.23} parent=0 // pred_check
    _
  $region3: #{tile.23} parent=0 // pred_check_branch
    %3 = sbr.rel (0) target = $region5
  $region4: #{tile.23} parent=0 // pred_region
    _
  $region5: #{tile.23} parent=0 // pred_fallthru
    _
  %v4 = vld [vmem:[%s0] ss:$0 sm:$0xff]
  %5 = vst [vmem:[%s1] sm:$0xff] %v4
  %s6 = scalar_lea.vmem %s1, 8
  %7 = vst [vmem:[%s6] sm:$0xff] %v4

// kernel: tile.36
$region0: #{tile.36}
  %s0 = inlined_call_operand.vmem [shape: f32[16,8], index: 0, kind: input, shape index: {}]
  %s1 = inlined_call_operand.vmem [shape: f32[1,128], index: 1, kind: output, shape index: {}]
  $region1: #{tile.36} parent=0
    #allocation0 [shape = 'u8[4096]{0}', space=vmem, size = 0x1000, scoped, tag = 'scoped mem for output reshape']
    %v2 = vld [vmem:[%s0] sm:$0x1]
    %vm3 = vcmask 64512
    %4 = vst.msk [vmem:[#allocation0] sm:$0x1] %vm3, %v2
    %s5 = scalar_lea.vmem %s0, 15
    %v6 = vld [vmem:[%s5] sm:$0x1]
    %7 = vrot.lane.b32.xlu0 %v6, 120
    %v8 = vpop.permute.xlu0 %7
    %vm9 = vcmask 1048512
    %10 = vst.msk [vmem:[#allocation0] sm:$0x1] %vm9, %v8
    %s11 = scalar_lea.vmem %s0, 14
    %v12 = vld [vmem:[%s11] sm:$0x1]
    %13 = vrot.lane.b32.xlu0 %v12, 112
    %v14 = vpop.permute.xlu0 %13
    %vm15 = vcmask 982912
    %16 = vst.msk [vmem:[#allocation0] sm:$0x1] %vm15, %v14
    %s17 = scalar_lea.vmem %s0, 13
    %v18 = vld [vmem:[%s17] sm:$0x1]
    %19 = vrot.lane.b32.xlu0 %v18, 104
    %v20 = vpop.permute.xlu0 %19
    %vm21 = vcmask 917312
    %22 = vst.msk [vmem:[#allocation0] sm:$0x1] %vm21, %v20
    %s23 = scalar_lea.vmem %s0, 12
    %v24 = vld [vmem:[%s23] sm:$0x1]
    %25 = vrot.lane.b32.xlu0 %v24, 96
    %v26 = vpop.permute.xlu0 %25
    %vm27 = vcmask 851712
    %28 = vst.msk [vmem:[#allocation0] sm:$0x1] %vm27, %v26
    %s29 = scalar_lea.vmem %s0, 11
    %v30 = vld [vmem:[%s29] sm:$0x1]
    %31 = vrot.lane.b32.xlu0 %v30, 88
    %v32 = vpop.permute.xlu0 %31
    %vm33 = vcmask 786112
    %34 = vst.msk [vmem:[#allocation0] sm:$0x1] %vm33, %v32
    %s35 = scalar_lea.vmem %s0, 10
    %v36 = vld [vmem:[%s35] sm:$0x1]
    %37 = vrot.lane.b32.xlu0 %v36, 80
    %v38 = vpop.permute.xlu0 %37
    %vm39 = vcmask 720512
    %40 = vst.msk [vmem:[#allocation0] sm:$0x1] %vm39, %v38
    %s41 = scalar_lea.vmem %s0, 9
    %v42 = vld [vmem:[%s41] sm:$0x1]
    %43 = vrot.lane.b32.xlu0 %v42, 72
    %v44 = vpop.permute.xlu0 %43
    %vm45 = vcmask 654912
    %46 = vst.msk [vmem:[#allocation0] sm:$0x1] %vm45, %v44
    %s47 = scalar_lea.vmem %s0, 8
    %v48 = vld [vmem:[%s47] sm:$0x1]
    %49 = vrot.lane.b32.xlu0 %v48, 64
    %v50 = vpop.permute.xlu0 %49
    %vm51 = vcmask 589312
    %52 = vst.msk [vmem:[#allocation0] sm:$0x1] %vm51, %v50
    %s53 = scalar_lea.vmem %s0, 7
    %v54 = vld [vmem:[%s53] sm:$0x1]
    %55 = vrot.lane.b32.xlu0 %v54, 56
    %v56 = vpop.permute.xlu0 %55
    %vm57 = vcmask 523712
    %58 = vst.msk [vmem:[#allocation0] sm:$0x1] %vm57, %v56
    %s59 = scalar_lea.vmem %s0, 6
    %v60 = vld [vmem:[%s59] sm:$0x1]
    %61 = vrot.lane.b32.xlu0 %v60, 48
    %v62 = vpop.permute.xlu0 %61
    %vm63 = vcmask 458112
    %64 = vst.msk [vmem:[#allocation0] sm:$0x1] %vm63, %v62
    %s65 = scalar_lea.vmem %s0, 5
    %v66 = vld [vmem:[%s65] sm:$0x1]
    %67 = vrot.lane.b32.xlu0 %v66, 40
    %v68 = vpop.permute.xlu0 %67
    %vm69 = vcmask 392512
    %70 = vst.msk [vmem:[#allocation0] sm:$0x1] %vm69, %v68
    %s71 = scalar_lea.vmem %s0, 4
    %v72 = vld [vmem:[%s71] sm:$0x1]
    %73 = vrot.lane.b32.xlu0 %v72, 32
    %v74 = vpop.permute.xlu0 %73
    %vm75 = vcmask 326912
    %76 = vst.msk [vmem:[#allocation0] sm:$0x1] %vm75, %v74
    %s77 = scalar_lea.vmem %s0, 3
    %v78 = vld [vmem:[%s77] sm:$0x1]
    %79 = vrot.lane.b32.xlu0 %v78, 24
    %v80 = vpop.permute.xlu0 %79
    %vm81 = vcmask 261312
    %82 = vst.msk [vmem:[#allocation0] sm:$0x1] %vm81, %v80
    %s83 = scalar_lea.vmem %s0, 2
    %v84 = vld [vmem:[%s83] sm:$0x1]
    %85 = vrot.lane.b32.xlu0 %v84, 16
    %v86 = vpop.permute.xlu0 %85
    %vm87 = vcmask 195712
    %88 = vst.msk [vmem:[#allocation0] sm:$0x1] %vm87, %v86
    %s89 = scalar_lea.vmem %s0, 1
    %v90 = vld [vmem:[%s89] sm:$0x1]
    %91 = vrot.lane.b32.xlu0 %v90, 8
    %v92 = vpop.permute.xlu0 %91
    %vm93 = vcmask 130112
    %94 = vst.msk [vmem:[#allocation0] sm:$0x1] %vm93, %v92
    %s96 = ssub.s32 2, 1
    %v97 = vld [vmem:[#allocation0] sm:%s96]
    %s99 = ssub.s32 2, 1
    %100 = vst [vmem:[%s1] sm:%s99] %v97

// kernel: basic_block_forward.1
$region0: #{basic_block_forward.1}
  #allocation0 [shape = 'u32[]', space=smem, size = 0x4, offset = 0x4, fixed_abs, tag = 'smem constant byte address 0x4 - core index']
  #allocation1 [shape = 'u32[72,128]{1,0:T(1,128)}', space=vmem, size = 0x9000, scoped, tag = 'internal scratch']
  #allocation2 [shape = 'bf16[2,18,128]{2,1,0:T(8,128)(2,1)}', space=vmem, size = 0x3000, scoped, tag = 'scratch operand']
  %s0 = inlined_call_operand.vmem [shape: f32[32,128], index: 0, kind: input, shape index: {}]
  %s1 = inlined_call_operand.vmem [shape: f32[4,128], index: 1, kind: input, shape index: {}]
  %s2 = inlined_call_operand.vmem [shape: bf16[384,128], index: 2, kind: input, shape index: {}]
  %s3 = inlined_call_operand.vmem [shape: bf16[384,128], index: 3, kind: input, shape index: {}]
  %s4 = inlined_call_operand.vmem [shape: f32[32,128], index: 4, kind: output, shape index: {}]
  %s5 = sld [smem:[#allocation0]]
  $region26: #{basic_block_forward.1} parent=0
    _
  %s7 = ssub.s32 1, %s5
  %s8 = scalar_select 0, %s7, %s5
  // Predicated region
  $region2: #{basic_block_forward.1} parent=0 // pred_check
    _
  $region3: #{basic_block_forward.1} parent=0 // pred_check_branch
    %10 = sbr.rel (0) target = $region5
  $region4: #{basic_block_forward.1} parent=0 // pred_region
    _
  $region5: #{basic_block_forward.1} parent=0 // pred_fallthru
    _
  // Predicated region
  $region6: #{basic_block_forward.1} parent=0 // pred_check
    _
  $region7: #{basic_block_forward.1} parent=0 // pred_check_branch
    %12 = sbr.rel (0) target = $region9
  $region8: #{basic_block_forward.1} parent=0 // pred_region
    _
  $region9: #{basic_block_forward.1} parent=0 // pred_fallthru
    _
  // Predicated region
  $region10: #{basic_block_forward.1} parent=0 // pred_check
    _
  $region11: #{basic_block_forward.1} parent=0 // pred_check_branch
    %14 = sbr.rel (0) target = $region13
  $region12: #{basic_block_forward.1} parent=0 // pred_region
    _
  $region13: #{basic_block_forward.1} parent=0 // pred_fallthru
    _
  // Predicated region
  $region14: #{basic_block_forward.1} parent=0 // pred_check
    _
  $region15: #{basic_block_forward.1} parent=0 // pred_check_branch
    %16 = sbr.rel (0) target = $region17
  $region16: #{basic_block_forward.1} parent=0 // pred_region
    _
  $region17: #{basic_block_forward.1} parent=0 // pred_fallthru
    _
  %vm18 = vcmask 1040384
  %vm19 = vsmask.f32 256
  %vm20 = vmand %vm18, %vm19
  %v21 = vld [vmem:[#allocation2] sm:$0x1]
  %v22 = vsel %vm20, 0, %v21
  %23 = vst [vmem:[#allocation2] sm:$0x1] %v22
  %v24 = vld [vmem:[#allocation2 + $0xc] sm:$0x1]
  %v25 = vsel %vm20, 0, %v24
  %26 = vst [vmem:[#allocation2 + $0xc] sm:$0x1] %v25
  %vm27 = vsmask.f32 7938
  %vm28 = vmand %vm18, %vm27
  %v29 = vld [vmem:[#allocation2 + $0x8] sm:$0x1]
  %v30 = vsel %vm28, 0, %v29
  %31 = vst [vmem:[#allocation2 + $0x8] sm:$0x1] %v30
  %v32 = vld [vmem:[#allocation2 + $0x14] sm:$0x1]
  %v33 = vsel %vm28, 0, %v32
  %34 = vst [vmem:[#allocation2 + $0x14] sm:$0x1] %v33
  %v35 = vld [vmem:[%s0] sm:$0xff]
  %v36 = vld [vmem:[%s0 + $0x8] sm:$0xff]
  %v37 = vld [vmem:[%s0 + $0x10] sm:$0xff]
  %v38 = vld [vmem:[%s0 + $0x18] sm:$0xff]
  %v39 = vpack.c.bf16 %v35, %v35
  %v40 = vpack.c.bf16 %v36, %v36
  %v41 = vpack.c.bf16 %v37, %v37
  %v42 = vpack.c.bf16 %v38, %v38
  %vm43 = vsmask.f32 4368
  %vm44 = vmor %vm19, %vm43
  %v46 = vshrl.u32 %v39, 16
  %v48 = vrot.slane %v46, 7
  %v49 = vshll.u32 %v39, 16
  %v51 = vor.u32 %v48, %v49
  %v52 = vrot.slane %v48, 4
  %v54 = vshrl.u32 %v40, 16
  %v56 = vrot.slane %v54, 7
  %v57 = vshll.u32 %v40, 16
  %v59 = vor.u32 %v56, %v57
  %v60 = vsel %vm44, %v52, %v59
  %v61 = vrot.slane %v56, 4
  %v63 = vshrl.u32 %v41, 16
  %v65 = vrot.slane %v63, 7
  %v66 = vshll.u32 %v41, 16
  %v68 = vor.u32 %v65, %v66
  %v69 = vrot.slane %v65, 4
  %v71 = vshrl.u32 %v42, 16
  %v73 = vrot.slane %v71, 7
  %v74 = vshll.u32 %v42, 16
  %v76 = vor.u32 %v73, %v74
  %v77 = vsel %vm44, %v69, %v76
  %v78 = vrot.slane %v73, 4
  %vm85 = vcmask 1043456
  %vm86 = vmand %vm85, %vm27
  %v87 = vld [vmem:[#allocation2] sm:$0xf]
  %v88 = vsel %vm86, %v51, %v87
  %89 = vst [vmem:[#allocation2] sm:$0xf] %v88
  %90 = vst [vmem:[#allocation2 + $0x4] sm:$0xf] %v60
  %v91 = vld [vmem:[#allocation2 + $0x8] sm:$0x1]
  %v92 = vsel %vm20, %v61, %v91
  %93 = vst [vmem:[#allocation2 + $0x8] sm:$0x1] %v92
  %v94 = vld [vmem:[#allocation2 + $0xc] sm:$0xf]
  %v95 = vsel %vm86, %v68, %v94
  %96 = vst [vmem:[#allocation2 + $0xc] sm:$0xf] %v95
  %97 = vst [vmem:[#allocation2 + $0x10] sm:$0xf] %v77
  %v98 = vld [vmem:[#allocation2 + $0x14] sm:$0x1]
  %v99 = vsel %vm20, %v78, %v98
  %100 = vst [vmem:[#allocation2 + $0x14] sm:$0x1] %v99
  %v101 = vld [vmem:[#allocation2] sm:$0xf]
  %v102 = vld [vmem:[#allocation2 + $0x4] sm:$0xf]
  %v103 = vld [vmem:[#allocation2 + $0xc] sm:$0xf]
  %v104 = vld [vmem:[#allocation2 + $0x10] sm:$0xf]
  %v105 = vld [vmem:[#allocation2] sm:$0xe]
  %v106 = vld [vmem:[#allocation2 + $0x8] sm:$0x1]
  %v107 = vld [vmem:[#allocation2 + $0xc] sm:$0xe]
  %v108 = vld [vmem:[#allocation2 + $0x14] sm:$0x1]
  %vm115 = vcmask 1042432
  %vm116 = vcmask 1046532
  %vm117 = vmor %vm115, %vm116
  %v118 = vrot.slane %v105, 5
  %v119 = vrot.slane %v118, 4
  %v120 = vrot.slane %v102, 5
  %v121 = vsel %vm117, %v119, %v120
  %v122 = vrot.slane %v120, 4
  %v123 = vrot.slane %v106, 5
  %v124 = vsel %vm117, %v122, %v123
  %v125 = vrot.slane %v107, 5
  %v126 = vrot.slane %v125, 4
  %v127 = vrot.slane %v104, 5
  %v128 = vsel %vm117, %v126, %v127
  %v129 = vrot.slane %v127, 4
  %v130 = vrot.slane %v108, 5
  %v131 = vsel %vm117, %v129, %v130
  %v134 = vunpack.c.l.b16 %v101
  %v135 = vunpack.c.l.b16 %v102
  %v136 = vunpack.c.l.b16 %v103
  %v137 = vunpack.c.l.b16 %v104
  %v138 = vpack.c.b16 %v135, %v134
  %v139 = vpack.c.b16 %v137, %v136
  %v146 = vunpack.c.l.b16 %v39
  %v147 = vunpack.c.l.b16 %v40
  %v148 = vunpack.c.l.b16 %v41
  %v149 = vunpack.c.l.b16 %v42
  %v150 = vpack.c.b16 %v147, %v146
  %v151 = vpack.c.b16 %v149, %v148
  %v154 = vunpack.c.l.b16 %v121
  %v155 = vunpack.c.l.b16 %v124
  %v156 = vunpack.c.l.b16 %v128
  %v157 = vunpack.c.l.b16 %v131
  %v158 = vpack.c.b16 %v155, %v154
  %v159 = vpack.c.b16 %v157, %v156
  %v162 = vld [vmem:[%s2] sm:$0xf]
  %v163 = vld [vmem:[%s2 + $0x4] sm:$0xf]
  %v164 = vld [vmem:[%s2 + $0x8] sm:$0xf]
  %v165 = vld [vmem:[%s2 + $0xc] sm:$0xf]
  %v166 = vld [vmem:[%s2 + $0x10] sm:$0xf]
  %v167 = vld [vmem:[%s2 + $0x14] sm:$0xf]
  %v168 = vld [vmem:[%s2 + $0x18] sm:$0xf]
  %v169 = vld [vmem:[%s2 + $0x1c] sm:$0xf]
  %v170 = vld [vmem:[%s2 + $0x20] sm:$0xf]
  %v171 = vld [vmem:[%s2 + $0x24] sm:$0xf]
  %v172 = vld [vmem:[%s2 + $0x28] sm:$0xf]
  %v173 = vld [vmem:[%s2 + $0x2c] sm:$0xf]
  %v174 = vld [vmem:[%s2 + $0x30] sm:$0xf]
  %v175 = vld [vmem:[%s2 + $0x34] sm:$0xf]
  %v176 = vld [vmem:[%s2 + $0x38] sm:$0xf]
  %v177 = vld [vmem:[%s2 + $0x3c] sm:$0xf]
  %v178 = vld [vmem:[%s2 + $0x40] sm:$0xf]
  %v179 = vld [vmem:[%s2 + $0x44] sm:$0xf]
  %v180 = vld [vmem:[%s2 + $0x48] sm:$0xf]
  %v181 = vld [vmem:[%s2 + $0x4c] sm:$0xf]
  %v182 = vld [vmem:[%s2 + $0x50] sm:$0xf]
  %v183 = vld [vmem:[%s2 + $0x54] sm:$0xf]
  %v184 = vld [vmem:[%s2 + $0x58] sm:$0xf]
  %v185 = vld [vmem:[%s2 + $0x5c] sm:$0xf]
  %v186 = vld [vmem:[%s2 + $0x60] sm:$0xf]
  %v187 = vld [vmem:[%s2 + $0x64] sm:$0xf]
  %v188 = vld [vmem:[%s2 + $0x68] sm:$0xf]
  %v189 = vld [vmem:[%s2 + $0x6c] sm:$0xf]
  %v190 = vld [vmem:[%s2 + $0x70] sm:$0xf]
  %v191 = vld [vmem:[%s2 + $0x74] sm:$0xf]
  %v192 = vld [vmem:[%s2 + $0x78] sm:$0xf]
  %v193 = vld [vmem:[%s2 + $0x7c] sm:$0xf]
  %v194 = vld [vmem:[%s2 + $0x80] sm:$0xf]
  %v195 = vld [vmem:[%s2 + $0x84] sm:$0xf]
  %v196 = vld [vmem:[%s2 + $0x88] sm:$0xf]
  %v197 = vld [vmem:[%s2 + $0x8c] sm:$0xf]
  %v198 = vld [vmem:[%s2 + $0x90] sm:$0xf]
  %v199 = vld [vmem:[%s2 + $0x94] sm:$0xf]
  %v200 = vld [vmem:[%s2 + $0x98] sm:$0xf]
  %v201 = vld [vmem:[%s2 + $0x9c] sm:$0xf]
  %v202 = vld [vmem:[%s2 + $0xa0] sm:$0xf]
  %v203 = vld [vmem:[%s2 + $0xa4] sm:$0xf]
  %v204 = vld [vmem:[%s2 + $0xa8] sm:$0xf]
  %v205 = vld [vmem:[%s2 + $0xac] sm:$0xf]
  %v206 = vld [vmem:[%s2 + $0xb0] sm:$0xf]
  %v207 = vld [vmem:[%s2 + $0xb4] sm:$0xf]
  %v208 = vld [vmem:[%s2 + $0xb8] sm:$0xf]
  %v209 = vld [vmem:[%s2 + $0xbc] sm:$0xf]
  %v258 = vunpack.c.l.b16 %v162
  %v259 = vunpack.c.l.b16 %v163
  %v260 = vunpack.c.l.b16 %v164
  %v261 = vunpack.c.l.b16 %v165
  %v262 = vunpack.c.l.b16 %v166
  %v263 = vunpack.c.l.b16 %v167
  %v264 = vunpack.c.l.b16 %v168
  %v265 = vunpack.c.l.b16 %v169
  %v266 = vunpack.c.l.b16 %v170
  %v267 = vunpack.c.l.b16 %v171
  %v268 = vunpack.c.l.b16 %v172
  %v269 = vunpack.c.l.b16 %v173
  %v270 = vunpack.c.l.b16 %v174
  %v271 = vunpack.c.l.b16 %v175
  %v272 = vunpack.c.l.b16 %v176
  %v273 = vunpack.c.l.b16 %v177
  %v274 = vunpack.c.l.b16 %v178
  %v275 = vunpack.c.l.b16 %v179
  %v276 = vunpack.c.l.b16 %v180
  %v277 = vunpack.c.l.b16 %v181
  %v278 = vunpack.c.l.b16 %v182
  %v279 = vunpack.c.l.b16 %v183
  %v280 = vunpack.c.l.b16 %v184
  %v281 = vunpack.c.l.b16 %v185
  %v282 = vunpack.c.l.b16 %v186
  %v283 = vunpack.c.l.b16 %v187
  %v284 = vunpack.c.l.b16 %v188
  %v285 = vunpack.c.l.b16 %v189
  %v286 = vunpack.c.l.b16 %v190
  %v287 = vunpack.c.l.b16 %v191
  %v288 = vunpack.c.l.b16 %v192
  %v289 = vunpack.c.l.b16 %v193
  %v290 = vunpack.c.l.b16 %v194
  %v291 = vunpack.c.l.b16 %v195
  %v292 = vunpack.c.l.b16 %v196
  %v293 = vunpack.c.l.b16 %v197
  %v294 = vunpack.c.l.b16 %v198
  %v295 = vunpack.c.l.b16 %v199
  %v296 = vunpack.c.l.b16 %v200
  %v297 = vunpack.c.l.b16 %v201
  %v298 = vunpack.c.l.b16 %v202
  %v299 = vunpack.c.l.b16 %v203
  %v300 = vunpack.c.l.b16 %v204
  %v301 = vunpack.c.l.b16 %v205
  %v302 = vunpack.c.l.b16 %v206
  %v303 = vunpack.c.l.b16 %v207
  %v304 = vunpack.c.l.b16 %v208
  %v305 = vunpack.c.l.b16 %v209
  %v306 = vpack.c.b16 %v259, %v258
  %v307 = vpack.c.b16 %v261, %v260
  %v308 = vpack.c.b16 %v263, %v262
  %v309 = vpack.c.b16 %v265, %v264
  %v310 = vpack.c.b16 %v267, %v266
  %v311 = vpack.c.b16 %v269, %v268
  %v312 = vpack.c.b16 %v271, %v270
  %v313 = vpack.c.b16 %v273, %v272
  %v314 = vpack.c.b16 %v275, %v274
  %v315 = vpack.c.b16 %v277, %v276
  %v316 = vpack.c.b16 %v279, %v278
  %v317 = vpack.c.b16 %v281, %v280
  %v318 = vpack.c.b16 %v283, %v282
  %v319 = vpack.c.b16 %v285, %v284
  %v320 = vpack.c.b16 %v287, %v286
  %v321 = vpack.c.b16 %v289, %v288
  %v322 = vpack.c.b16 %v291, %v290
  %v323 = vpack.c.b16 %v293, %v292
  %v324 = vpack.c.b16 %v295, %v294
  %v325 = vpack.c.b16 %v297, %v296
  %v326 = vpack.c.b16 %v299, %v298
  %v327 = vpack.c.b16 %v301, %v300
  %v328 = vpack.c.b16 %v303, %v302
  %v329 = vpack.c.b16 %v305, %v304
  %354 = vmatpush.bf16.msra.mxu0 %v313
  %355 = vmatpush.bf16.msra.mxu0 %v312
  %356 = vmatpush.bf16.msra.mxu0 %v311
  %357 = vmatpush.bf16.msra.mxu0 %v310
  %358 = vmatpush.bf16.msra.mxu0 %v309
  %359 = vmatpush.bf16.msra.mxu0 %v308
  %360 = vmatpush.bf16.msra.mxu0 %v307
  %361 = vmatpush.bf16.msra.mxu0 %v306
  %362 = vmatmul.bf16.gmra.mxu0 %v138
  %v363 = vpop.f32.mrf.mxu0
  %v364 = vadd.f32 0.0, %v363
  %v365 = vpop.f32.mrf.mxu0
  %v366 = vadd.f32 0.0, %v365
  %367 = vmatmul.bf16.gmra.mxu0 %v139
  %v368 = vpop.f32.mrf.mxu0
  %v369 = vadd.f32 0.0, %v368
  %v370 = vpop.f32.mrf.mxu0
  %v371 = vadd.f32 0.0, %v370
  %372 = vdwg.mxu0
  %373 = vmatpush.bf16.msra.mxu0 %v321
  %374 = vmatpush.bf16.msra.mxu0 %v320
  %375 = vmatpush.bf16.msra.mxu0 %v319
  %376 = vmatpush.bf16.msra.mxu0 %v318
  %377 = vmatpush.bf16.msra.mxu0 %v317
  %378 = vmatpush.bf16.msra.mxu0 %v316
  %379 = vmatpush.bf16.msra.mxu0 %v315
  %380 = vmatpush.bf16.msra.mxu0 %v314
  %381 = vmatmul.bf16.gmra.mxu0 %v150
  %v382 = vpop.f32.mrf.mxu0
  %v383 = vadd.f32 %v364, %v382
  %v384 = vpop.f32.mrf.mxu0
  %v385 = vadd.f32 %v366, %v384
  %386 = vmatmul.bf16.gmra.mxu0 %v151
  %v387 = vpop.f32.mrf.mxu0
  %v388 = vadd.f32 %v369, %v387
  %v389 = vpop.f32.mrf.mxu0
  %v390 = vadd.f32 %v371, %v389
  %391 = vdwg.mxu0
  %392 = vmatpush.bf16.msra.mxu0 %v329
  %393 = vmatpush.bf16.msra.mxu0 %v328
  %394 = vmatpush.bf16.msra.mxu0 %v327
  %395 = vmatpush.bf16.msra.mxu0 %v326
  %396 = vmatpush.bf16.msra.mxu0 %v325
  %397 = vmatpush.bf16.msra.mxu0 %v324
  %398 = vmatpush.bf16.msra.mxu0 %v323
  %399 = vmatpush.bf16.msra.mxu0 %v322
  %400 = vmatmul.bf16.gmra.mxu0 %v158
  %v401 = vpop.f32.mrf.mxu0
  %v402 = vadd.f32 %v383, %v401
  %v403 = vpop.f32.mrf.mxu0
  %v404 = vadd.f32 %v385, %v403
  %405 = vmatmul.bf16.gmra.mxu0 %v159
  %v406 = vpop.f32.mrf.mxu0
  %v407 = vadd.f32 %v388, %v406
  %v408 = vpop.f32.mrf.mxu0
  %v409 = vadd.f32 %v390, %v408
  %410 = vdwg.mxu0
  %v411 = vld [vmem:[%s1] sm:$0x1]
  %v412 = vld [vmem:[%s1 + $0x1] sm:$0x1]
  %v413 = vadd.f32 %v402, %v404
  %v414 = vadd.f32 %v413, %v407
  %v415 = vadd.f32 %v414, %v409
  %v416 = vrot.slane %v415, 4
  %v417 = vadd.f32 %v415, %v416
  %v418 = vrot.slane %v417, 2
  %v419 = vadd.f32 %v417, %v418
  %v420 = vrot.slane %v419, 1
  %v421 = vadd.f32 %v419, %v420
  %v422 = vmul.f32 %v402, %v402
  %v423 = vmul.f32 %v404, %v404
  %v424 = vmul.f32 %v407, %v407
  %v425 = vmul.f32 %v409, %v409
  %v426 = vadd.f32 %v422, %v423
  %v427 = vadd.f32 %v426, %v424
  %v428 = vadd.f32 %v427, %v425
  %v429 = vrot.slane %v428, 4
  %v430 = vadd.f32 %v428, %v429
  %v431 = vrot.slane %v430, 2
  %v432 = vadd.f32 %v430, %v431
  %v433 = vrot.slane %v432, 1
  %v434 = vadd.f32 %v432, %v433
  %vm435 = vcmask 1040384
  %v436 = vsel %vm435, %v421, %v434
  %437 = vrot.lane.b32.xlu0 %v436, 8
  %v438 = vpop.permute.xlu0 %437
  %v439 = vadd.f32 %v436, %v438
  %440 = vrot.lane.b32.xlu0 %v439, 16
  %v441 = vpop.permute.xlu0 %440
  %v442 = vadd.f32 %v439, %v441
  %443 = vrot.lane.b32.xlu0 %v442, 32
  %v444 = vpop.permute.xlu0 %443
  %v445 = vadd.f32 %v442, %v444
  %446 = vrot.lane.b32.xlu0 %v445, 64
  %v447 = vpop.permute.xlu0 %446
  %v448 = vadd.f32 %v445, %v447
  %v449 = vmul.f32 %v448, 0.001953125
  %v450 = vmul.f32 %v449, %v449
  %v452 = vrot.slane %v450, 7
  %v454 = vsub.f32 %v449, %v452
  %v455 = vadd.f32 %v454, 1e-05
  %v456 = vrsqrt.pop %v455
  %v457 = vmul.f32 %v456, %v455
  %v458 = vmul.f32 %v457, %v456
  %v459 = vmul.f32 0.5, %v458
  %v460 = vsub.f32 1.5, %v459
  %v461 = vmul.f32 %v456, %v460
  %vm462 = vweird.f32 %v455
  %vm463 = vweird.f32 %v456
  %vm464 = vmor %vm462, %vm463
  %v465 = vsel %vm464, %v456, %v461
  %v467 = vrot.slane %v465, 1
  %v469 = vmul.f32 %v411, %v467
  %v470 = vmul.f32 %v449, %v469
  %v471 = vsub.f32 %v412, %v470
  %v472 = vperm.slane %v469, 0
  %v473 = vmul.f32 %v402, %v472
  %v474 = vmul.f32 %v404, %v472
  %v475 = vmul.f32 %v407, %v472
  %v476 = vmul.f32 %v409, %v472
  %v477 = vperm.slane %v471, 0
  %v478 = vadd.f32 %v473, %v477
  %v479 = vadd.f32 %v474, %v477
  %v480 = vadd.f32 %v475, %v477
  %v481 = vadd.f32 %v476, %v477
  %v482 = vmax.f32 %v478, 0.0
  %v483 = vmax.f32 %v479, 0.0
  %v484 = vmax.f32 %v480, 0.0
  %v485 = vmax.f32 %v481, 0.0
  %v486 = vpack.c.bf16 %v482, %v482
  %v487 = vpack.c.bf16 %v483, %v483
  %v488 = vpack.c.bf16 %v484, %v484
  %v489 = vpack.c.bf16 %v485, %v485
  %v491 = vshrl.u32 %v486, 16
  %v493 = vrot.slane %v491, 7
  %v494 = vshll.u32 %v486, 16
  %v496 = vor.u32 %v493, %v494
  %v497 = vrot.slane %v493, 4
  %v499 = vshrl.u32 %v487, 16
  %v501 = vrot.slane %v499, 7
  %v502 = vshll.u32 %v487, 16
  %v504 = vor.u32 %v501, %v502
  %v505 = vsel %vm44, %v497, %v504
  %v506 = vrot.slane %v501, 4
  %v508 = vshrl.u32 %v488, 16
  %v510 = vrot.slane %v508, 7
  %v511 = vshll.u32 %v488, 16
  %v513 = vor.u32 %v510, %v511
  %v514 = vrot.slane %v510, 4
  %v516 = vshrl.u32 %v489, 16
  %v518 = vrot.slane %v516, 7
  %v519 = vshll.u32 %v489, 16
  %v521 = vor.u32 %v518, %v519
  %v522 = vsel %vm44, %v514, %v521
  %v523 = vrot.slane %v518, 4
  %v530 = vld [vmem:[#allocation2] sm:$0xf]
  %v531 = vsel %vm86, %v496, %v530
  %532 = vst [vmem:[#allocation2] sm:$0xf] %v531
  %533 = vst [vmem:[#allocation2 + $0x4] sm:$0xf] %v505
  %v534 = vld [vmem:[#allocation2 + $0x8] sm:$0x1]
  %v535 = vsel %vm20, %v506, %v534
  %536 = vst [vmem:[#allocation2 + $0x8] sm:$0x1] %v535
  %v537 = vld [vmem:[#allocation2 + $0xc] sm:$0xf]
  %v538 = vsel %vm86, %v513, %v537
  %539 = vst [vmem:[#allocation2 + $0xc] sm:$0xf] %v538
  %540 = vst [vmem:[#allocation2 + $0x10] sm:$0xf] %v522
  %v541 = vld [vmem:[#allocation2 + $0x14] sm:$0x1]
  %v542 = vsel %vm20, %v523, %v541
  %543 = vst [vmem:[#allocation2 + $0x14] sm:$0x1] %v542
  %v544 = vld [vmem:[#allocation2] sm:$0xf]
  %v545 = vld [vmem:[#allocation2 + $0x4] sm:$0xf]
  %v546 = vld [vmem:[#allocation2 + $0xc] sm:$0xf]
  %v547 = vld [vmem:[#allocation2 + $0x10] sm:$0xf]
  %v548 = vld [vmem:[#allocation2] sm:$0xe]
  %v549 = vld [vmem:[#allocation2 + $0x8] sm:$0x1]
  %v550 = vld [vmem:[#allocation2 + $0xc] sm:$0xe]
  %v551 = vld [vmem:[#allocation2 + $0x14] sm:$0x1]
  %v558 = vrot.slane %v548, 5
  %v559 = vrot.slane %v558, 4
  %v560 = vrot.slane %v545, 5
  %v561 = vsel %vm117, %v559, %v560
  %v562 = vrot.slane %v560, 4
  %v563 = vrot.slane %v549, 5
  %v564 = vsel %vm117, %v562, %v563
  %v565 = vrot.slane %v550, 5
  %v566 = vrot.slane %v565, 4
  %v567 = vrot.slane %v547, 5
  %v568 = vsel %vm117, %v566, %v567
  %v569 = vrot.slane %v567, 4
  %v570 = vrot.slane %v551, 5
  %v571 = vsel %vm117, %v569, %v570
  %v574 = vunpack.c.l.b16 %v544
  %v575 = vunpack.c.l.b16 %v545
  %v576 = vunpack.c.l.b16 %v546
  %v577 = vunpack.c.l.b16 %v547
  %v578 = vpack.c.b16 %v575, %v574
  %v579 = vpack.c.b16 %v577, %v576
  %v586 = vunpack.c.l.b16 %v486
  %v587 = vunpack.c.l.b16 %v487
  %v588 = vunpack.c.l.b16 %v488
  %v589 = vunpack.c.l.b16 %v489
  %v590 = vpack.c.b16 %v587, %v586
  %v591 = vpack.c.b16 %v589, %v588
  %v594 = vunpack.c.l.b16 %v561
  %v595 = vunpack.c.l.b16 %v564
  %v596 = vunpack.c.l.b16 %v568
  %v597 = vunpack.c.l.b16 %v571
  %v598 = vpack.c.b16 %v595, %v594
  %v599 = vpack.c.b16 %v597, %v596
  %v602 = vld [vmem:[%s3] sm:$0xf]
  %v603 = vld [vmem:[%s3 + $0x4] sm:$0xf]
  %v604 = vld [vmem:[%s3 + $0x8] sm:$0xf]
  %v605 = vld [vmem:[%s3 + $0xc] sm:$0xf]
  %v606 = vld [vmem:[%s3 + $0x10] sm:$0xf]
  %v607 = vld [vmem:[%s3 + $0x14] sm:$0xf]
  %v608 = vld [vmem:[%s3 + $0x18] sm:$0xf]
  %v609 = vld [vmem:[%s3 + $0x1c] sm:$0xf]
  %v610 = vld [vmem:[%s3 + $0x20] sm:$0xf]
  %v611 = vld [vmem:[%s3 + $0x24] sm:$0xf]
  %v612 = vld [vmem:[%s3 + $0x28] sm:$0xf]
  %v613 = vld [vmem:[%s3 + $0x2c] sm:$0xf]
  %v614 = vld [vmem:[%s3 + $0x30] sm:$0xf]
  %v615 = vld [vmem:[%s3 + $0x34] sm:$0xf]
  %v616 = vld [vmem:[%s3 + $0x38] sm:$0xf]
  %v617 = vld [vmem:[%s3 + $0x3c] sm:$0xf]
  %v618 = vld [vmem:[%s3 + $0x40] sm:$0xf]
  %v619 = vld [vmem:[%s3 + $0x44] sm:$0xf]
  %v620 = vld [vmem:[%s3 + $0x48] sm:$0xf]
  %v621 = vld [vmem:[%s3 + $0x4c] sm:$0xf]
  %v622 = vld [vmem:[%s3 + $0x50] sm:$0xf]
  %v623 = vld [vmem:[%s3 + $0x54] sm:$0xf]
  %v624 = vld [vmem:[%s3 + $0x58] sm:$0xf]
  %v625 = vld [vmem:[%s3 + $0x5c] sm:$0xf]
  %v626 = vld [vmem:[%s3 + $0x60] sm:$0xf]
  %v627 = vld [vmem:[%s3 + $0x64] sm:$0xf]
  %v628 = vld [vmem:[%s3 + $0x68] sm:$0xf]
  %v629 = vld [vmem:[%s3 + $0x6c] sm:$0xf]
  %v630 = vld [vmem:[%s3 + $0x70] sm:$0xf]
  %v631 = vld [vmem:[%s3 + $0x74] sm:$0xf]
  %v632 = vld [vmem:[%s3 + $0x78] sm:$0xf]
  %v633 = vld [vmem:[%s3 + $0x7c] sm:$0xf]
  %v634 = vld [vmem:[%s3 + $0x80] sm:$0xf]
  %v635 = vld [vmem:[%s3 + $0x84] sm:$0xf]
  %v636 = vld [vmem:[%s3 + $0x88] sm:$0xf]
  %v637 = vld [vmem:[%s3 + $0x8c] sm:$0xf]
  %v638 = vld [vmem:[%s3 + $0x90] sm:$0xf]
  %v639 = vld [vmem:[%s3 + $0x94] sm:$0xf]
  %v640 = vld [vmem:[%s3 + $0x98] sm:$0xf]
  %v641 = vld [vmem:[%s3 + $0x9c] sm:$0xf]
  %v642 = vld [vmem:[%s3 + $0xa0] sm:$0xf]
  %v643 = vld [vmem:[%s3 + $0xa4] sm:$0xf]
  %v644 = vld [vmem:[%s3 + $0xa8] sm:$0xf]
  %v645 = vld [vmem:[%s3 + $0xac] sm:$0xf]
  %v646 = vld [vmem:[%s3 + $0xb0] sm:$0xf]
  %v647 = vld [vmem:[%s3 + $0xb4] sm:$0xf]
  %v648 = vld [vmem:[%s3 + $0xb8] sm:$0xf]
  %v649 = vld [vmem:[%s3 + $0xbc] sm:$0xf]
  %v698 = vunpack.c.l.b16 %v602
  %v699 = vunpack.c.l.b16 %v603
  %v700 = vunpack.c.l.b16 %v604
  %v701 = vunpack.c.l.b16 %v605
  %v702 = vunpack.c.l.b16 %v606
  %v703 = vunpack.c.l.b16 %v607
  %v704 = vunpack.c.l.b16 %v608
  %v705 = vunpack.c.l.b16 %v609
  %v706 = vunpack.c.l.b16 %v610
  %v707 = vunpack.c.l.b16 %v611
  %v708 = vunpack.c.l.b16 %v612
  %v709 = vunpack.c.l.b16 %v613
  %v710 = vunpack.c.l.b16 %v614
  %v711 = vunpack.c.l.b16 %v615
  %v712 = vunpack.c.l.b16 %v616
  %v713 = vunpack.c.l.b16 %v617
  %v714 = vunpack.c.l.b16 %v618
  %v715 = vunpack.c.l.b16 %v619
  %v716 = vunpack.c.l.b16 %v620
  %v717 = vunpack.c.l.b16 %v621
  %v718 = vunpack.c.l.b16 %v622
  %v719 = vunpack.c.l.b16 %v623
  %v720 = vunpack.c.l.b16 %v624
  %v721 = vunpack.c.l.b16 %v625
  %v722 = vunpack.c.l.b16 %v626
  %v723 = vunpack.c.l.b16 %v627
  %v724 = vunpack.c.l.b16 %v628
  %v725 = vunpack.c.l.b16 %v629
  %v726 = vunpack.c.l.b16 %v630
  %v727 = vunpack.c.l.b16 %v631
  %v728 = vunpack.c.l.b16 %v632
  %v729 = vunpack.c.l.b16 %v633
  %v730 = vunpack.c.l.b16 %v634
  %v731 = vunpack.c.l.b16 %v635
  %v732 = vunpack.c.l.b16 %v636
  %v733 = vunpack.c.l.b16 %v637
  %v734 = vunpack.c.l.b16 %v638
  %v735 = vunpack.c.l.b16 %v639
  %v736 = vunpack.c.l.b16 %v640
  %v737 = vunpack.c.l.b16 %v641
  %v738 = vunpack.c.l.b16 %v642
  %v739 = vunpack.c.l.b16 %v643
  %v740 = vunpack.c.l.b16 %v644
  %v741 = vunpack.c.l.b16 %v645
  %v742 = vunpack.c.l.b16 %v646
  %v743 = vunpack.c.l.b16 %v647
  %v744 = vunpack.c.l.b16 %v648
  %v745 = vunpack.c.l.b16 %v649
  %v746 = vpack.c.b16 %v699, %v698
  %v747 = vpack.c.b16 %v701, %v700
  %v748 = vpack.c.b16 %v703, %v702
  %v749 = vpack.c.b16 %v705, %v704
  %v750 = vpack.c.b16 %v707, %v706
  %v751 = vpack.c.b16 %v709, %v708
  %v752 = vpack.c.b16 %v711, %v710
  %v753 = vpack.c.b16 %v713, %v712
  %v754 = vpack.c.b16 %v715, %v714
  %v755 = vpack.c.b16 %v717, %v716
  %v756 = vpack.c.b16 %v719, %v718
  %v757 = vpack.c.b16 %v721, %v720
  %v758 = vpack.c.b16 %v723, %v722
  %v759 = vpack.c.b16 %v725, %v724
  %v760 = vpack.c.b16 %v727, %v726
  %v761 = vpack.c.b16 %v729, %v728
  %v762 = vpack.c.b16 %v731, %v730
  %v763 = vpack.c.b16 %v733, %v732
  %v764 = vpack.c.b16 %v735, %v734
  %v765 = vpack.c.b16 %v737, %v736
  %v766 = vpack.c.b16 %v739, %v738
  %v767 = vpack.c.b16 %v741, %v740
  %v768 = vpack.c.b16 %v743, %v742
  %v769 = vpack.c.b16 %v745, %v744
  %794 = vmatpush.bf16.msra.mxu0 %v753
  %795 = vmatpush.bf16.msra.mxu0 %v752
  %796 = vmatpush.bf16.msra.mxu0 %v751
  %797 = vmatpush.bf16.msra.mxu0 %v750
  %798 = vmatpush.bf16.msra.mxu0 %v749
  %799 = vmatpush.bf16.msra.mxu0 %v748
  %800 = vmatpush.bf16.msra.mxu0 %v747
  %801 = vmatpush.bf16.msra.mxu0 %v746
  %802 = vmatmul.bf16.gmra.mxu0 %v578
  %v803 = vpop.f32.mrf.mxu0
  %v804 = vadd.f32 0.0, %v803
  %v805 = vpop.f32.mrf.mxu0
  %v806 = vadd.f32 0.0, %v805
  %807 = vmatmul.bf16.gmra.mxu0 %v579
  %v808 = vpop.f32.mrf.mxu0
  %v809 = vadd.f32 0.0, %v808
  %v810 = vpop.f32.mrf.mxu0
  %v811 = vadd.f32 0.0, %v810
  %812 = vdwg.mxu0
  %813 = vmatpush.bf16.msra.mxu0 %v761
  %814 = vmatpush.bf16.msra.mxu0 %v760
  %815 = vmatpush.bf16.msra.mxu0 %v759
  %816 = vmatpush.bf16.msra.mxu0 %v758
  %817 = vmatpush.bf16.msra.mxu0 %v757
  %818 = vmatpush.bf16.msra.mxu0 %v756
  %819 = vmatpush.bf16.msra.mxu0 %v755
  %820 = vmatpush.bf16.msra.mxu0 %v754
  %821 = vmatmul.bf16.gmra.mxu0 %v590
  %v822 = vpop.f32.mrf.mxu0
  %v823 = vadd.f32 %v804, %v822
  %v824 = vpop.f32.mrf.mxu0
  %v825 = vadd.f32 %v806, %v824
  %826 = vmatmul.bf16.gmra.mxu0 %v591
  %v827 = vpop.f32.mrf.mxu0
  %v828 = vadd.f32 %v809, %v827
  %v829 = vpop.f32.mrf.mxu0
  %v830 = vadd.f32 %v811, %v829
  %831 = vdwg.mxu0
  %832 = vmatpush.bf16.msra.mxu0 %v769
  %833 = vmatpush.bf16.msra.mxu0 %v768
  %834 = vmatpush.bf16.msra.mxu0 %v767
  %835 = vmatpush.bf16.msra.mxu0 %v766
  %836 = vmatpush.bf16.msra.mxu0 %v765
  %837 = vmatpush.bf16.msra.mxu0 %v764
  %838 = vmatpush.bf16.msra.mxu0 %v763
  %839 = vmatpush.bf16.msra.mxu0 %v762
  %840 = vmatmul.bf16.gmra.mxu0 %v598
  %v841 = vpop.f32.mrf.mxu0
  %v842 = vadd.f32 %v823, %v841
  %v843 = vpop.f32.mrf.mxu0
  %v844 = vadd.f32 %v825, %v843
  %845 = vmatmul.bf16.gmra.mxu0 %v599
  %v846 = vpop.f32.mrf.mxu0
  %v847 = vadd.f32 %v828, %v846
  %v848 = vpop.f32.mrf.mxu0
  %v849 = vadd.f32 %v830, %v848
  %850 = vdwg.mxu0
  %v851 = vld [vmem:[%s1 + $0x2] sm:$0x1]
  %v852 = vld [vmem:[%s1 + $0x3] sm:$0x1]
  %v853 = vadd.f32 %v842, %v844
  %v854 = vadd.f32 %v853, %v847
  %v855 = vadd.f32 %v854, %v849
  %v856 = vrot.slane %v855, 4
  %v857 = vadd.f32 %v855, %v856
  %v858 = vrot.slane %v857, 2
  %v859 = vadd.f32 %v857, %v858
  %v860 = vrot.slane %v859, 1
  %v861 = vadd.f32 %v859, %v860
  %v862 = vmul.f32 %v842, %v842
  %v863 = vmul.f32 %v844, %v844
  %v864 = vmul.f32 %v847, %v847
  %v865 = vmul.f32 %v849, %v849
  %v866 = vadd.f32 %v862, %v863
  %v867 = vadd.f32 %v866, %v864
  %v868 = vadd.f32 %v867, %v865
  %v869 = vrot.slane %v868, 4
  %v870 = vadd.f32 %v868, %v869
  %v871 = vrot.slane %v870, 2
  %v872 = vadd.f32 %v870, %v871
  %v873 = vrot.slane %v872, 1
  %v874 = vadd.f32 %v872, %v873
  %v875 = vsel %vm435, %v861, %v874
  %876 = vrot.lane.b32.xlu0 %v875, 8
  %v877 = vpop.permute.xlu0 %876
  %v878 = vadd.f32 %v875, %v877
  %879 = vrot.lane.b32.xlu0 %v878, 16
  %v880 = vpop.permute.xlu0 %879
  %v881 = vadd.f32 %v878, %v880
  %882 = vrot.lane.b32.xlu0 %v881, 32
  %v883 = vpop.permute.xlu0 %882
  %v884 = vadd.f32 %v881, %v883
  %885 = vrot.lane.b32.xlu0 %v884, 64
  %v886 = vpop.permute.xlu0 %885
  %v887 = vadd.f32 %v884, %v886
  %v888 = vmul.f32 %v887, 0.001953125
  %v889 = vmul.f32 %v888, %v888
  %v891 = vrot.slane %v889, 7
  %v893 = vsub.f32 %v888, %v891
  %v894 = vadd.f32 %v893, 1e-05
  %v895 = vrsqrt.pop %v894
  %v896 = vmul.f32 %v895, %v894
  %v897 = vmul.f32 %v896, %v895
  %v898 = vmul.f32 0.5, %v897
  %v899 = vsub.f32 1.5, %v898
  %v900 = vmul.f32 %v895, %v899
  %vm901 = vweird.f32 %v894
  %vm902 = vweird.f32 %v895
  %vm903 = vmor %vm901, %vm902
  %v904 = vsel %vm903, %v895, %v900
  %v906 = vrot.slane %v904, 1
  %v908 = vmul.f32 %v851, %v906
  %v909 = vmul.f32 %v888, %v908
  %v910 = vsub.f32 %v852, %v909
  %v911 = vperm.slane %v908, 0
  %v912 = vmul.f32 %v842, %v911
  %v913 = vmul.f32 %v844, %v911
  %v914 = vmul.f32 %v847, %v911
  %v915 = vmul.f32 %v849, %v911
  %v916 = vperm.slane %v910, 0
  %v917 = vadd.f32 %v912, %v916
  %v918 = vadd.f32 %v913, %v916
  %v919 = vadd.f32 %v914, %v916
  %v920 = vadd.f32 %v915, %v916
  %v921 = vadd.f32 %v917, %v35
  %v922 = vadd.f32 %v918, %v36
  %v923 = vadd.f32 %v919, %v37
  %v924 = vadd.f32 %v920, %v38
  %v925 = vmax.f32 %v921, 0.0
  %v926 = vmax.f32 %v922, 0.0
  %v927 = vmax.f32 %v923, 0.0
  %v928 = vmax.f32 %v924, 0.0
  %929 = vst [vmem:[%s4] sm:$0xff] %v925
  %930 = vst [vmem:[%s4 + $0x8] sm:$0xff] %v926
  %931 = vst [vmem:[%s4 + $0x10] sm:$0xff] %v927
  %932 = vst [vmem:[%s4 + $0x18] sm:$0xff] %v928
  // Predicated region
  $region18: #{basic_block_forward.1} parent=0 // pred_check
    _
  $region19: #{basic_block_forward.1} parent=0 // pred_check_branch
    %934 = sbr.rel (0) target = $region21
  $region20: #{basic_block_forward.1} parent=0 // pred_region
    _
  $region21: #{basic_block_forward.1} parent=0 // pred_fallthru
    _
  // Predicated region
  $region22: #{basic_block_forward.1} parent=0 // pred_check
    _
  $region23: #{basic_block_forward.1} parent=0 // pred_check_branch
    %936 = sbr.rel (0) target = $region25
  $region24: #{basic_block_forward.1} parent=0 // pred_region
    _
  $region25: #{basic_block_forward.1} parent=0 // pred_fallthru
    _

</llo_original>
